<compile_context>
chip_gen: v7x
topology: tpu7x:2x2x1
jax: 0.10.0
libtpu: 0.0.40
codegen_flags: <defaults>
</compile_context>

<pallas_src>
import math

import jax
import jax.numpy as jnp
from jax.experimental import pallas as pl
from jax.experimental.pallas import tpu as pltpu


def _gcn_kernel(x_ref, att_ref, wk_ref, b_ref, o_ref):
    """One grid step = one batch-fold chunk.

    x_ref:   (1, N, cb*F_in)      batch chunk, batch folded into lanes
    att_ref: (N, N)               adjacency / attention matrix
    wk_ref:  (cb*F_in, cb*F_out)  block-diagonal kron(I_cb, W)
    b_ref:   (1, cb*F_out)        float32 bias, tiled over the fold
    o_ref:   (1, N, cb*F_out)
    """
    # Dot 1: mix over nodes, f32 accumulation on the MXU.
    ax = jnp.dot(att_ref[...], x_ref[0], preferred_element_type=jnp.float32)
    # Keep dot 2 on the same (possibly bf16) MXU path: without this cast `ax`
    # is f32 and the dot silently promotes to a multi-pass f32 matmul even
    # when the operands were cast to bf16.
    wk = wk_ref[...]
    ax = ax.astype(wk.dtype)
    out = jnp.dot(ax, wk, preferred_element_type=jnp.float32)
    # Single f32 bias add, single lane-dense store (cb*F_out multiple of 128).
    o_ref[0] = (out + b_ref[...]).astype(o_ref.dtype)


def graph_convolution(x, weight, att, bias=None, *, compute_dtype=None,
                      max_fold=8):
    """GCN layer forward: att @ (x @ weight) + bias.

    x: (B, N, F_in), weight: (F_in, F_out), att: (N, N), bias: (F_out,) or None.

    compute_dtype: optionally run the matmuls with bf16 operands (recommended
        on v5e / v6e / v7x; halves DMA bytes and uses the bf16-native MXU).
        Accumulation, the bias add, and the output dtype stay float32 / x's
        dtype.  Store weight/att in bf16 persistently to avoid per-call casts.
    max_fold: max batch elements folded into one grid step's lane dimension.
    """
    B, N, F_in = x.shape
    F_out = weight.shape[1]
    out_dtype = x.dtype

    if compute_dtype is not None:
        # Only cast when the caller has not already stored the tensors in
        # compute_dtype (avoids an extra un-fused HBM round trip per call).
        if x.dtype != compute_dtype:
            x = x.astype(compute_dtype)
        if weight.dtype != compute_dtype:
            weight = weight.astype(compute_dtype)
        if att.dtype != compute_dtype:
            att = att.astype(compute_dtype)

    # ---- choose the batch fold (cb) -------------------------------------
    # Fold up to `max_fold` batch elements into lanes; prefer a fold that
    # makes the output last dim a multiple of 128 (fully unmasked stores).
    cb = max(1, min(B, max_fold))
    for c in range(cb, 0, -1):
        if (c * F_out) % 128 == 0:
            cb = c
            break

    num_chunks = pl.cdiv(B, cb)
    b_pad = num_chunks * cb
    if b_pad != B:
        # Explicit zero padding: padded rows do well-defined wasted work and
        # are sliced off below (never read back as garbage).
        x = jnp.concatenate(
            [x, jnp.zeros((b_pad - B, N, F_in), x.dtype)], axis=0)

    # ---- wrapper-side layout plumbing (no in-kernel reshapes) ------------
    # (b_pad, N, F_in) -> (num_chunks, N, cb*F_in): batch folded into lanes.
    x_folded = (x.reshape(num_chunks, cb, N, F_in)
                 .transpose(0, 2, 1, 3)
                 .reshape(num_chunks, N, cb * F_in))
    # Block-diagonal projection: one dot projects every batch element in the
    # fold and emits a lane-dense (N, cb*F_out) tile.
    w_kron = jnp.kron(jnp.eye(cb, dtype=weight.dtype), weight)
    if bias is None:
        bias = jnp.zeros((F_out,), jnp.float32)
    bias_folded = jnp.tile(bias.astype(jnp.float32), cb).reshape(1, cb * F_out)

    itemsize = lambda a: jnp.dtype(a.dtype).itemsize
    cost = pl.CostEstimate(
        flops=2 * num_chunks * (N * N * (cb * F_in)
                                + N * (cb * F_in) * (cb * F_out)),
        transcendentals=0,
        bytes_accessed=(x_folded.size * itemsize(x_folded)
                        + att.size * itemsize(att)
                        + w_kron.size * itemsize(w_kron)
                        + bias_folded.size * itemsize(bias_folded)
                        + num_chunks * N * cb * F_out
                        * jnp.dtype(out_dtype).itemsize),
    )

    out_folded = pl.pallas_call(
        _gcn_kernel,
        out_shape=jax.ShapeDtypeStruct((num_chunks, N, cb * F_out), out_dtype),
        grid_spec=pltpu.PrefetchScalarGridSpec(
            num_scalar_prefetch=0,
            grid=(num_chunks,),
            in_specs=[
                pl.BlockSpec((1, N, cb * F_in), lambda i: (i, 0, 0)),
                pl.BlockSpec((N, N), lambda i: (0, 0)),
                pl.BlockSpec((cb * F_in, cb * F_out), lambda i: (0, 0)),
                pl.BlockSpec((1, cb * F_out), lambda i: (0, 0)),
            ],
            out_specs=pl.BlockSpec((1, N, cb * F_out), lambda i: (i, 0, 0)),
        ),
        compiler_params=pltpu.CompilerParams(
            dimension_semantics=("parallel",),
        ),
        cost_estimate=cost,
    )(x_folded, att, w_kron, bias_folded)

    # Unfold: (num_chunks, N, cb*F_out) -> (B, N, F_out).
    out = (out_folded.reshape(num_chunks, N, cb, F_out)
                     .transpose(0, 2, 1, 3)
                     .reshape(b_pad, N, F_out))
    return out[:B]


if __name__ == "__main__":
    # Module hyper-parameters (small, consistent with the PyTorch module).
    in_features = 32
    out_features = 64
    node_n = 45
    batch = 2

    key = jax.random.PRNGKey(0)
    kx, kw, ka, kb, kx3 = jax.random.split(key, 5)

    # Deterministic init mirroring reset_parameters(): uniform(-stdv, stdv),
    # stdv = 1 / sqrt(out_features).
    stdv = 1.0 / math.sqrt(out_features)
    weight = jax.random.uniform(kw, (in_features, out_features),
                                minval=-stdv, maxval=stdv, dtype=jnp.float32)
    att = jax.random.uniform(ka, (node_n, node_n),
                             minval=-stdv, maxval=stdv, dtype=jnp.float32)
    bias = jax.random.uniform(kb, (out_features,),
                              minval=-stdv, maxval=stdv, dtype=jnp.float32)

    x = jax.random.normal(kx, (batch, node_n, in_features), dtype=jnp.float32)

    # Pure-JAX reference (PyTorch order: att @ (x @ W) + bias).
    ref = jnp.matmul(att, jnp.matmul(x, weight)) + bias

    # Default f32 path (matches PyTorch forward semantics).
    out_f32 = jax.block_until_ready(graph_convolution(x, weight, att, bias))
    assert out_f32.shape == (batch, node_n, out_features)
    assert out_f32.dtype == x.dtype
    # The kernel evaluates (att@x)@W_blockdiag — same math as att@(x@W) but
    # rounds differently at the ulp level.
    assert jnp.allclose(out_f32, ref, atol=1e-4, rtol=1e-4)

    # bf16-operand path recommended on v5e / v6e / v7x (f32 accumulation).
    out_bf16 = jax.block_until_ready(
        graph_convolution(x, weight, att, bias, compute_dtype=jnp.bfloat16))
    assert out_bf16.shape == (batch, node_n, out_features)
    assert out_bf16.dtype == x.dtype
    assert jnp.allclose(out_bf16, ref, atol=5e-2, rtol=5e-2)

    # Odd batch exercises the zero-padding + multi-chunk grid path.
    x3 = jax.random.normal(kx3, (3, node_n, in_features), dtype=jnp.float32)
    ref3 = jnp.matmul(att, jnp.matmul(x3, weight)) + bias
    out3 = jax.block_until_ready(graph_convolution(x3, weight, att, bias))
    assert out3.shape == (3, node_n, out_features)
    assert jnp.allclose(out3, ref3, atol=1e-4, rtol=1e-4)

    print("KERNEL_OK")
</pallas_src>

<mosaic_0001>
module attributes {stable_mosaic.version = 11 : i64} {
  func.func @_gcn_kernel(%arg0: i32, %arg1: memref<1x45x64xf32, #tpu.memory_space<vmem>>, %arg2: memref<45x45xf32, #tpu.memory_space<vmem>>, %arg3: memref<64x128xf32, #tpu.memory_space<vmem>>, %arg4: memref<1x128xf32, #tpu.memory_space<vmem>>, %arg5: memref<1x45x128xf32, #tpu.memory_space<vmem>>) attributes {dimension_semantics = [#tpu.dimension_semantics<parallel>], iteration_bounds = array<i64: 1>, scalar_prefetch = 0 : i64, scratch_operands = 0 : i64, tpu.core_type = #tpu.core_type<tc>, window_params = [{transform_indices = @transform_0, window_bounds = array<i64: 1, 45, 64>}, {pipeline_mode = #tpu.pipeline_mode<synchronous>, transform_indices = @transform_1, window_bounds = array<i64: 45, 45>}, {pipeline_mode = #tpu.pipeline_mode<synchronous>, transform_indices = @transform_2, window_bounds = array<i64: 64, 128>}, {pipeline_mode = #tpu.pipeline_mode<synchronous>, transform_indices = @transform_3, window_bounds = array<i64: 1, 128>}, {transform_indices = @transform_4, window_bounds = array<i64: 1, 45, 128>}]} {
    %c0 = arith.constant 0 : index
    %c0_0 = arith.constant 0 : index
    %0 = vector.load %arg2[%c0, %c0_0] : memref<45x45xf32, #tpu.memory_space<vmem>>, vector<45x45xf32>
    %c0_1 = arith.constant 0 : index
    %c0_2 = arith.constant 0 : index
    %c0_3 = arith.constant 0 : index
    %1 = vector.load %arg1[%c0_1, %c0_2, %c0_3] : memref<1x45x64xf32, #tpu.memory_space<vmem>>, vector<1x45x64xf32>
    %2 = vector.shape_cast %1 : vector<1x45x64xf32> to vector<45x64xf32>
    %cst = arith.constant dense<0.000000e+00> : vector<45x64xf32>
    %3 = tpu.matmul %0, %2, %cst {dimension_numbers = #tpu.dot_dimension_numbers<[1], [0], [0], [1], [0, 0, 1, 1], [], []>} : vector<45x45xf32>, vector<45x64xf32>, vector<45x64xf32> -> vector<45x64xf32>
    %c0_4 = arith.constant 0 : index
    %c0_5 = arith.constant 0 : index
    %4 = vector.load %arg3[%c0_4, %c0_5] : memref<64x128xf32, #tpu.memory_space<vmem>>, vector<64x128xf32>
    %cst_6 = arith.constant dense<0.000000e+00> : vector<45x128xf32>
    %5 = tpu.matmul %3, %4, %cst_6 {dimension_numbers = #tpu.dot_dimension_numbers<[1], [0], [0], [1], [0, 0, 1, 1], [], []>} : vector<45x64xf32>, vector<64x128xf32>, vector<45x128xf32> -> vector<45x128xf32>
    %c0_7 = arith.constant 0 : index
    %c0_8 = arith.constant 0 : index
    %6 = vector.load %arg4[%c0_7, %c0_8] : memref<1x128xf32, #tpu.memory_space<vmem>>, vector<1x128xf32>
    %7 = vector.broadcast %6 : vector<1x128xf32> to vector<45x128xf32>
    %8 = arith.addf %5, %7 : vector<45x128xf32>
    %c0_9 = arith.constant 0 : index
    %c0_10 = arith.constant 0 : index
    %c0_11 = arith.constant 0 : index
    %9 = vector.load %arg5[%c0_9, %c0_10, %c0_11] : memref<1x45x128xf32, #tpu.memory_space<vmem>>, vector<1x45x128xf32>
    %10 = vector.shape_cast %9 : vector<1x45x128xf32> to vector<45x128xf32>
    %11 = vector.shape_cast %8 : vector<45x128xf32> to vector<1x45x128xf32>
    tpu.vector_store %arg5[%c0_9, %c0_10, %c0_11], %11 {strides = array<i32>} : memref<1x45x128xf32, #tpu.memory_space<vmem>>, vector<1x45x128xf32>,
    return
  }
  func.func @transform_0(%arg0: i32) -> (i32, i32, i32) {
    %c0_i32 = arith.constant 0 : i32
    %c0_i32_0 = arith.constant 0 : i32
    %c0_i32_1 = arith.constant 0 : i32
    return %arg0, %c0_i32, %c0_i32_0 : i32, i32, i32
  }
  func.func @transform_1(%arg0: i32) -> (i32, i32) {
    %c0_i32 = arith.constant 0 : i32
    %c0_i32_0 = arith.constant 0 : i32
    %c0_i32_1 = arith.constant 0 : i32
    return %c0_i32, %c0_i32_0 : i32, i32
  }
  func.func @transform_2(%arg0: i32) -> (i32, i32) {
    %c0_i32 = arith.constant 0 : i32
    %c0_i32_0 = arith.constant 0 : i32
    %c0_i32_1 = arith.constant 0 : i32
    return %c0_i32, %c0_i32_0 : i32, i32
  }
  func.func @transform_3(%arg0: i32) -> (i32, i32) {
    %c0_i32 = arith.constant 0 : i32
    %c0_i32_0 = arith.constant 0 : i32
    %c0_i32_1 = arith.constant 0 : i32
    return %c0_i32, %c0_i32_0 : i32, i32
  }
  func.func @transform_4(%arg0: i32) -> (i32, i32, i32) {
    %c0_i32 = arith.constant 0 : i32
    %c0_i32_0 = arith.constant 0 : i32
    %c0_i32_1 = arith.constant 0 : i32
    return %arg0, %c0_i32, %c0_i32_0 : i32, i32, i32
  }
}

</mosaic_0001>

<llo_original>
// kernel: tpu_custom_call.1
$region0: #{tpu_custom_call.1}
  #allocation0 [shape = 'u32[]', space=smem, size = 0x4, offset = 0x4, fixed_abs, tag = 'smem constant byte address 0x4 - core index']
  #allocation1 [shape = 'u32[144,128]{1,0:T(1,128)}', space=vmem, size = 0x12000, scoped, tag = 'internal scratch']
  %s0 = inlined_call_operand.vmem [shape: f32[1,45,64], index: 0, kind: input, shape index: {}]
  %s1 = inlined_call_operand.hbm [shape: f32[45,45], index: 1, kind: input, shape index: {}]
  %s2 = inlined_call_operand.vmem [shape: f32[64,128], index: 2, kind: input, shape index: {}]
  %s3 = inlined_call_operand.vmem [shape: f32[1,128], index: 3, kind: input, shape index: {}]
  %s4 = inlined_call_operand.vmem [shape: f32[1,45,128], index: 4, kind: output, shape index: {}]
  %s5 = sld [smem:[#allocation0]]
  $region30: #{tpu_custom_call.1} parent=0
    _
  %s7 = ssub.s32 1, %s5
  %s8 = scalar_select 0, %s7, %s5
  $region1: #{tpu_custom_call.1} parent=0
    #allocation2 [shape = 'u8[24576]{0}', space=vmem, size = 0x6000, scoped, tag = 'input window, operand 1, single buffered']
    #allocation3 [shape = 's32[1]{0}', space=sflag, size = 0x4, scoped, tag = 'scoped memory for tpu_custom_call.1']
    %9 = vsyncpa [#allocation3], 0
    // Predicated region
    $region2: #{tpu_custom_call.1} parent=1 // pred_check
      _
    $region3: #{tpu_custom_call.1} parent=1 // pred_check_branch
      %11 = sbr.rel (0) target = $region5
    $region4: #{tpu_custom_call.1} parent=1 // pred_region
      _
    $region5: #{tpu_custom_call.1} parent=1 // pred_fallthru
      _
    // Predicated region
    $region6: #{tpu_custom_call.1} parent=1 // pred_check
      _
    $region7: #{tpu_custom_call.1} parent=1 // pred_check_branch
      %13 = sbr.rel (0) target = $region9
    $region8: #{tpu_custom_call.1} parent=1 // pred_region
      %s15 = ssub.s32 768, 768
      %16 = vsyncadd [#allocation3], %s15
      %s17 = sshll.u32 [#allocation2], 4
      %s18 = int_to_ptr.vmem [resolvable:$true] %s17
      %23 = dma.hbm_to_vmem [thread:$0]  %s1, 768, %s18, [#allocation3], 128, 128, 8
    $region9: #{tpu_custom_call.1} parent=1 // pred_fallthru
      _
    // Predicated region
    $region10: #{tpu_custom_call.1} parent=1 // pred_check
      _
    $region11: #{tpu_custom_call.1} parent=1 // pred_check_branch
      %25 = sbr.rel (0) target = $region13
    $region12: #{tpu_custom_call.1} parent=1 // pred_region
      _
    $region13: #{tpu_custom_call.1} parent=1 // pred_fallthru
      _
    // Predicated region
    $region14: #{tpu_custom_call.1} parent=1 // pred_check
      _
    $region15: #{tpu_custom_call.1} parent=1 // pred_check_branch
      %27 = sbr.rel (0) target = $region17
    $region16: #{tpu_custom_call.1} parent=1 // pred_region
      _
    $region17: #{tpu_custom_call.1} parent=1 // pred_fallthru
      _
    // Predicated region
    $region18: #{tpu_custom_call.1} parent=1 // pred_check
      _
    $region19: #{tpu_custom_call.1} parent=1 // pred_check_branch
      %29 = sbr.rel (0) target = $region21
    $region20: #{tpu_custom_call.1} parent=1 // pred_region
      %30 = dma.done [#allocation3], 768
    $region21: #{tpu_custom_call.1} parent=1 // pred_fallthru
      _
    %v31 = vld [vmem:[#allocation2] sm:$0xff]
    %v32 = vld [vmem:[#allocation2 + $0x8] sm:$0xff]
    %v33 = vld [vmem:[#allocation2 + $0x10] sm:$0xff]
    %v34 = vld [vmem:[#allocation2 + $0x18] sm:$0xff]
    %v35 = vld [vmem:[#allocation2 + $0x20] sm:$0xff]
    %v36 = vld [vmem:[#allocation2 + $0x28] sm:$0x1f]
    %v37 = vld [vmem:[%s0] sm:$0xff]
    %v38 = vld [vmem:[%s0 + $0x8] sm:$0xff]
    %v39 = vld [vmem:[%s0 + $0x10] sm:$0xff]
    %v40 = vld [vmem:[%s0 + $0x18] sm:$0xff]
    %v41 = vld [vmem:[%s0 + $0x20] sm:$0xff]
    %v42 = vld [vmem:[%s0 + $0x28] sm:$0x1f]
    %vm43 = vcmask 367616
    %v45 = vsel %vm43, %v31, 0
    %v48 = vsel %vm43, %v32, 0
    %v51 = vsel %vm43, %v33, 0
    %v54 = vsel %vm43, %v34, 0
    %v57 = vsel %vm43, %v35, 0
    %v60 = vsel %vm43, %v36, 0
    %vm62 = vcmask 1044480
    %v64 = vsel %vm62, %v42, 0
    %66 = vmatprep.subr.mxu0 0.0
    %67 = vmatpush1.msra.mxu0 %v37
    %68 = vmatprep.subr.mxu0 0.0
    %69 = vmatpush1.msra.mxu0 %v38
    %70 = vmatprep.subr.mxu0 0.0
    %71 = vmatpush1.msra.mxu0 %v39
    %72 = vmatprep.subr.mxu0 0.0
    %73 = vmatpush1.msra.mxu0 %v40
    %74 = vmatprep.subr.mxu0 0.0
    %75 = vmatpush1.msra.mxu0 %v41
    %76 = vmatprep.subr.mxu0 0.0
    %77 = vmatpush1.msra.mxu0 %v64
    %78 = vmatprep.subr.mxu0 0.0
    %79 = vmatpush1.msra.mxu0 0.0
    %80 = vmatprep.subr.mxu0 0.0
    %81 = vmatpush1.msra.mxu0 0.0
    %82 = vmatprep.subr.mxu0 0.0
    %83 = vmatpush1.msra.mxu0 0.0
    %84 = vmatprep.subr.mxu0 0.0
    %85 = vmatpush1.msra.mxu0 0.0
    %86 = vmatprep.subr.mxu0 0.0
    %87 = vmatpush1.msra.mxu0 0.0
    %88 = vmatprep.subr.mxu0 0.0
    %89 = vmatpush1.msra.mxu0 0.0
    %90 = vmatprep.subr.mxu0 0.0
    %91 = vmatpush1.msra.mxu0 0.0
    %92 = vmatprep.subr.mxu0 0.0
    %93 = vmatpush1.msra.mxu0 0.0
    %94 = vmatprep.subr.mxu0 0.0
    %95 = vmatpush1.msra.mxu0 0.0
    %96 = vmatprep.subr.mxu0 0.0
    %97 = vmatpush1.msra.mxu0 0.0
    %98 = vmatprep.subr.mxu0 0.0
    %99 = vmatpush1.msra.mxu0 0.0
    %100 = vmatprep.subr.mxu0 0.0
    %101 = vmatpush1.msra.mxu0 0.0
    %102 = vmatprep.subr.mxu0 0.0
    %103 = vmatpush1.msra.mxu0 0.0
    %104 = vmatprep.subr.mxu0 0.0
    %105 = vmatpush1.msra.mxu0 0.0
    %106 = vmatprep.subr.mxu0 0.0
    %107 = vmatpush1.msra.mxu0 0.0
    %108 = vmatprep.subr.mxu0 0.0
    %109 = vmatpush1.msra.mxu0 0.0
    %110 = vmatprep.subr.mxu0 0.0
    %111 = vmatpush1.msra.mxu0 0.0
    %112 = vmatprep.subr.mxu0 0.0
    %113 = vmatpush1.msra.mxu0 0.0
    %114 = vmatprep.subr.mxu0 0.0
    %115 = vmatpush1.msra.mxu0 0.0
    %116 = vmatprep.subr.mxu0 0.0
    %117 = vmatpush1.msra.mxu0 0.0
    %118 = vmatprep.subr.mxu0 0.0
    %119 = vmatpush1.msra.mxu0 0.0
    %120 = vmatprep.subr.mxu0 0.0
    %121 = vmatpush1.msra.mxu0 0.0
    %122 = vmatprep.subr.mxu0 0.0
    %123 = vmatpush1.msra.mxu0 0.0
    %124 = vmatprep.subr.mxu0 0.0
    %125 = vmatpush1.msra.mxu0 0.0
    %126 = vmatprep.subr.mxu0 0.0
    %127 = vmatpush1.msra.mxu0 0.0
    %128 = vmatprep.subr.mxu0 0.0
    %129 = vmatpush1.msra.mxu0 0.0
    %130 = vmatprep.mubr.f32.mxu0 0.0
    %131 = vmatmul.mubr.f32.gmra.mrb[0].mxu0 %v45
    %v132 = vpop.f32.mrb[0].mxu0
    %v133 = vadd.f32 0.0, %v132
    %v134 = vpop.f32.mrb[0].mxu0
    %135 = vmatprep.mubr.f32.mxu0 0.0
    %136 = vmatmul.mubr.f32.gmra.mrb[0].mxu0 %v48
    %v137 = vpop.f32.mrb[0].mxu0
    %v138 = vadd.f32 0.0, %v137
    %v139 = vpop.f32.mrb[0].mxu0
    %140 = vmatprep.mubr.f32.mxu0 0.0
    %141 = vmatmul.mubr.f32.gmra.mrb[0].mxu0 %v51
    %v142 = vpop.f32.mrb[0].mxu0
    %v143 = vadd.f32 0.0, %v142
    %v144 = vpop.f32.mrb[0].mxu0
    %145 = vmatprep.mubr.f32.mxu0 0.0
    %146 = vmatmul.mubr.f32.gmra.mrb[0].mxu0 %v54
    %v147 = vpop.f32.mrb[0].mxu0
    %v148 = vadd.f32 0.0, %v147
    %v149 = vpop.f32.mrb[0].mxu0
    %150 = vmatprep.mubr.f32.mxu0 0.0
    %151 = vmatmul.mubr.f32.gmra.mrb[0].mxu0 %v57
    %v152 = vpop.f32.mrb[0].mxu0
    %v153 = vadd.f32 0.0, %v152
    %v154 = vpop.f32.mrb[0].mxu0
    %155 = vmatprep.mubr.f32.mxu0 0.0
    %156 = vmatmul.mubr.f32.gmra.mrb[0].mxu0 %v60
    %v157 = vpop.f32.mrb[0].mxu0
    %v158 = vadd.f32 0.0, %v157
    %v159 = vpop.f32.mrb[0].mxu0
    %160 = vdwg.mxu0
    %v161 = vld [vmem:[%s2] sm:$0xff]
    %v162 = vld [vmem:[%s2 + $0x8] sm:$0xff]
    %v163 = vld [vmem:[%s2 + $0x10] sm:$0xff]
    %v164 = vld [vmem:[%s2 + $0x18] sm:$0xff]
    %v165 = vld [vmem:[%s2 + $0x20] sm:$0xff]
    %v166 = vld [vmem:[%s2 + $0x28] sm:$0xff]
    %v167 = vld [vmem:[%s2 + $0x30] sm:$0xff]
    %v168 = vld [vmem:[%s2 + $0x38] sm:$0xff]
    %v169 = vld [vmem:[%s3] sm:$0x1]
    %v171 = vlaneseq
    %v172 = vshrl.u32 %v171, 7
    %v173 = vsub.s32 0, %v172
    %v174 = vrot.slane %v169, %v173
    %vm176 = vcmask 523264
    %v178 = vsel %vm176, %v133, 0
    %v181 = vsel %vm176, %v138, 0
    %v184 = vsel %vm176, %v143, 0
    %v187 = vsel %vm176, %v148, 0
    %v190 = vsel %vm176, %v153, 0
    %v193 = vsel %vm176, %v158, 0
    %195 = vmatprep.subr.mxu0 0.0
    %196 = vmatpush1.msra.mxu0 %v161
    %197 = vmatprep.subr.mxu0 0.0
    %198 = vmatpush1.msra.mxu0 %v162
    %199 = vmatprep.subr.mxu0 0.0
    %200 = vmatpush1.msra.mxu0 %v163
    %201 = vmatprep.subr.mxu0 0.0
    %202 = vmatpush1.msra.mxu0 %v164
    %203 = vmatprep.subr.mxu0 0.0
    %204 = vmatpush1.msra.mxu0 %v165
    %205 = vmatprep.subr.mxu0 0.0
    %206 = vmatpush1.msra.mxu0 %v166
    %207 = vmatprep.subr.mxu0 0.0
    %208 = vmatpush1.msra.mxu0 %v167
    %209 = vmatprep.subr.mxu0 0.0
    %210 = vmatpush1.msra.mxu0 %v168
    %211 = vmatprep.subr.mxu0 0.0
    %212 = vmatpush1.msra.mxu0 0.0
    %213 = vmatprep.subr.mxu0 0.0
    %214 = vmatpush1.msra.mxu0 0.0
    %215 = vmatprep.subr.mxu0 0.0
    %216 = vmatpush1.msra.mxu0 0.0
    %217 = vmatprep.subr.mxu0 0.0
    %218 = vmatpush1.msra.mxu0 0.0
    %219 = vmatprep.subr.mxu0 0.0
    %220 = vmatpush1.msra.mxu0 0.0
    %221 = vmatprep.subr.mxu0 0.0
    %222 = vmatpush1.msra.mxu0 0.0
    %223 = vmatprep.subr.mxu0 0.0
    %224 = vmatpush1.msra.mxu0 0.0
    %225 = vmatprep.subr.mxu0 0.0
    %226 = vmatpush1.msra.mxu0 0.0
    %227 = vmatprep.subr.mxu0 0.0
    %228 = vmatpush1.msra.mxu0 0.0
    %229 = vmatprep.subr.mxu0 0.0
    %230 = vmatpush1.msra.mxu0 0.0
    %231 = vmatprep.subr.mxu0 0.0
    %232 = vmatpush1.msra.mxu0 0.0
    %233 = vmatprep.subr.mxu0 0.0
    %234 = vmatpush1.msra.mxu0 0.0
    %235 = vmatprep.subr.mxu0 0.0
    %236 = vmatpush1.msra.mxu0 0.0
    %237 = vmatprep.subr.mxu0 0.0
    %238 = vmatpush1.msra.mxu0 0.0
    %239 = vmatprep.subr.mxu0 0.0
    %240 = vmatpush1.msra.mxu0 0.0
    %241 = vmatprep.subr.mxu0 0.0
    %242 = vmatpush1.msra.mxu0 0.0
    %243 = vmatprep.subr.mxu0 0.0
    %244 = vmatpush1.msra.mxu0 0.0
    %245 = vmatprep.subr.mxu0 0.0
    %246 = vmatpush1.msra.mxu0 0.0
    %247 = vmatprep.subr.mxu0 0.0
    %248 = vmatpush1.msra.mxu0 0.0
    %249 = vmatprep.subr.mxu0 0.0
    %250 = vmatpush1.msra.mxu0 0.0
    %251 = vmatprep.subr.mxu0 0.0
    %252 = vmatpush1.msra.mxu0 0.0
    %253 = vmatprep.subr.mxu0 0.0
    %254 = vmatpush1.msra.mxu0 0.0
    %255 = vmatprep.subr.mxu0 0.0
    %256 = vmatpush1.msra.mxu0 0.0
    %257 = vmatprep.subr.mxu0 0.0
    %258 = vmatpush1.msra.mxu0 0.0
    %259 = vmatprep.mubr.f32.mxu0 0.0
    %260 = vmatmul.mubr.f32.gmra.mrb[0].mxu0 %v178
    %v261 = vpop.f32.mrb[0].mxu0
    %v262 = vadd.f32 %v174, %v261
    %v263 = vpop.f32.mrb[0].mxu0
    %264 = vmatprep.mubr.f32.mxu0 0.0
    %265 = vmatmul.mubr.f32.gmra.mrb[0].mxu0 %v181
    %v266 = vpop.f32.mrb[0].mxu0
    %v267 = vadd.f32 %v174, %v266
    %v268 = vpop.f32.mrb[0].mxu0
    %269 = vmatprep.mubr.f32.mxu0 0.0
    %270 = vmatmul.mubr.f32.gmra.mrb[0].mxu0 %v184
    %v271 = vpop.f32.mrb[0].mxu0
    %v272 = vadd.f32 %v174, %v271
    %v273 = vpop.f32.mrb[0].mxu0
    %274 = vmatprep.mubr.f32.mxu0 0.0
    %275 = vmatmul.mubr.f32.gmra.mrb[0].mxu0 %v187
    %v276 = vpop.f32.mrb[0].mxu0
    %v277 = vadd.f32 %v174, %v276
    %v278 = vpop.f32.mrb[0].mxu0
    %279 = vmatprep.mubr.f32.mxu0 0.0
    %280 = vmatmul.mubr.f32.gmra.mrb[0].mxu0 %v190
    %v281 = vpop.f32.mrb[0].mxu0
    %v282 = vadd.f32 %v174, %v281
    %v283 = vpop.f32.mrb[0].mxu0
    %284 = vmatprep.mubr.f32.mxu0 0.0
    %285 = vmatmul.mubr.f32.gmra.mrb[0].mxu0 %v193
    %v286 = vpop.f32.mrb[0].mxu0
    %v287 = vadd.f32 %v174, %v286
    %v288 = vpop.f32.mrb[0].mxu0
    %289 = vdwg.mxu0
    %290 = vst [vmem:[%s4] sm:$0xff] %v262
    %291 = vst [vmem:[%s4 + $0x8] sm:$0xff] %v267
    %292 = vst [vmem:[%s4 + $0x10] sm:$0xff] %v272
    %293 = vst [vmem:[%s4 + $0x18] sm:$0xff] %v277
    %294 = vst [vmem:[%s4 + $0x20] sm:$0xff] %v282
    %295 = vst [vmem:[%s4 + $0x28] sm:$0x1f] %v287
    // Predicated region
    $region22: #{tpu_custom_call.1} parent=1 // pred_check
      _
    $region23: #{tpu_custom_call.1} parent=1 // pred_check_branch
      %297 = sbr.rel (0) target = $region25
    $region24: #{tpu_custom_call.1} parent=1 // pred_region
      _
    $region25: #{tpu_custom_call.1} parent=1 // pred_fallthru
      _
    // Predicated region
    $region26: #{tpu_custom_call.1} parent=1 // pred_check
      _
    $region27: #{tpu_custom_call.1} parent=1 // pred_check_branch
      %299 = sbr.rel (0) target = $region29
    $region28: #{tpu_custom_call.1} parent=1 // pred_region
      _
    $region29: #{tpu_custom_call.1} parent=1 // pred_fallthru
      _
    %300 = vsyncpa [#allocation3], 1

</llo_original>
